<compile_context>
chip_gen: v7x
topology: tpu7x:2x2x1
jax: 0.10.0
libtpu: 0.0.40
codegen_flags: <defaults>
</compile_context>

<pallas_src>
import functools

import jax
import jax.numpy as jnp
from jax.experimental import pallas as pl
from jax.experimental.pallas import tpu as pltpu


# ---------------------------------------------------------------------------
# Kernels
# ---------------------------------------------------------------------------

def _bn_stream_kernel(x_ref, bias_ref, rm_ref, out_ref, new_rm_ref, shift_ref,
                      *, inv_count, momentum):
    """Two-pass streaming kernel.  grid = (c_tiles, 2, n_blocks, hw_blocks).

    pass 0: accumulate per-channel sums of x into shift_ref (f32).
    pass 1: out = x + (bias - mean).
    When n_blocks == hw_blocks == 1 the x block index never changes between the
    two passes, so the block stays resident and HBM traffic is 1R + 1W.
    """
    p = pl.program_id(1)                  # 0 = accumulate, 1 = center & write
    nn = pl.program_id(2)                 # batch-block index
    hh = pl.program_id(3)                 # HW-block index
    last_n = pl.num_programs(2) - 1
    last_h = pl.num_programs(3) - 1

    @pl.when((p == 0) & (nn == 0) & (hh == 0))
    def _init():
        shift_ref[...] = jnp.zeros_like(shift_ref)

    @pl.when(p == 0)
    def _accumulate():
        xf = x_ref[...].astype(jnp.float32)                       # (bn, tc, hw_t)
        part = jnp.sum(xf, axis=-1, keepdims=True)                # (bn, tc, 1)
        shift_ref[...] += jnp.sum(part, axis=0, keepdims=True)    # (1, tc, 1)

    @pl.when((p == 0) & (nn == last_n) & (hh == last_h))
    def _finalize():
        mean = shift_ref[...] * inv_count                         # (1, tc, 1)
        rm = rm_ref[...].astype(jnp.float32)
        new_rm_ref[...] = ((1.0 - momentum) * rm
                           + momentum * mean).astype(new_rm_ref.dtype)
        # pass 1 becomes a single broadcast add
        shift_ref[...] = bias_ref[...].astype(jnp.float32) - mean

    @pl.when(p == 1)
    def _center():
        xf = x_ref[...].astype(jnp.float32)                       # no-op cast for f32
        out_ref[...] = (xf + shift_ref[...]).astype(out_ref.dtype)


def _bn_cached_kernel(x_ref, bias_ref, rm_ref, out_ref, new_rm_ref,
                      cache_ref, shift_ref, *, inv_count, momentum):
    """Two-pass kernel with the whole channel-tile slab cached in VMEM.
    grid = (c_tiles, 2, n_blocks).  Pass 0 streams x once (stashing each block
    in cache_ref); the x BlockSpec is pinned to the last pass-0 block during
    pass 1, so no DMA is re-issued and HBM traffic is 1R + 1W.
    """
    p = pl.program_id(1)
    nn = pl.program_id(2)
    last_n = pl.num_programs(2) - 1

    @pl.when((p == 0) & (nn == 0))
    def _init():
        shift_ref[...] = jnp.zeros_like(shift_ref)

    @pl.when(p == 0)
    def _accumulate():
        x = x_ref[...]                                            # (bn, tc, hw)
        cache_ref[nn] = x                                         # stash for pass 1
        xf = x.astype(jnp.float32)
        part = jnp.sum(xf, axis=-1, keepdims=True)                # (bn, tc, 1)
        shift_ref[...] += jnp.sum(part, axis=0, keepdims=True)    # (1, tc, 1)

    @pl.when((p == 0) & (nn == last_n))
    def _finalize():
        mean = shift_ref[...] * inv_count
        rm = rm_ref[...].astype(jnp.float32)
        new_rm_ref[...] = ((1.0 - momentum) * rm
                           + momentum * mean).astype(new_rm_ref.dtype)
        shift_ref[...] = bias_ref[...].astype(jnp.float32) - mean

    @pl.when(p == 1)
    def _center():
        xf = cache_ref[nn].astype(jnp.float32)                    # VMEM only, no HBM read
        out_ref[...] = (xf + shift_ref[...]).astype(out_ref.dtype)


# ---------------------------------------------------------------------------
# Tiling / planning helpers
# ---------------------------------------------------------------------------

def _vmem_capacity_bytes():
    try:
        info = pltpu.get_tpu_info()
        cap = int(getattr(info, "vmem_capacity_bytes", 0) or 0)
        if cap > 0:
            return cap
    except Exception:
        pass
    return 64 * 1024 * 1024          # conservative default (v7x figure)


def _num_tensorcores():
    try:
        info = pltpu.get_tpu_info()
        for name in ("num_cores", "core_count", "num_tensorcores", "tensorcore_count"):
            v = getattr(info, name, None)
            if v:
                return int(v)
    except Exception:
        pass
    # v7x (64 MiB VMEM per TC) has 2 TensorCores/chip; v5e/v6e have 1.
    return 2 if _vmem_capacity_bytes() <= 64 * 1024 * 1024 else 1


def _sublane_multiple(dtype):
    itemsize = jnp.dtype(dtype).itemsize
    if itemsize >= 4:
        return 8
    if itemsize == 2:
        return 16
    return 32


def _divisors_desc(n):
    return [d for d in range(n, 0, -1) if n % d == 0]


def _plan_tiles(n, c, hw, itemsize, sub, budget, ncores):
    """Pick (mode, tile_c, bn, hw_t).

    mode == "resident": the whole (N, tile_c, hw) slab stays in VMEM -> 1R + 1W.
    mode == "stream":   two reads + one write, optionally with lane (HW) tiling.
    """
    step_target = 2 * 1024 * 1024            # aim for >= ~2 MiB per grid step
    c_cands = [d for d in _divisors_desc(c) if d == c or d % sub == 0]
    n_divs = _divisors_desc(n)

    def resident_bytes(tc, bn):
        nb = n // bn
        buffers = 4 * bn * tc * hw * itemsize             # double-buffered in/out blocks
        cache = 0 if nb == 1 else n * tc * hw * itemsize  # VMEM copy of the slab
        return buffers + cache

    def pick_bn(tc, hw_t, fits):
        feas = [bn for bn in n_divs if fits(tc, bn)]
        if not feas:
            return None
        # smallest bn whose per-step block already reaches step_target (less
        # VMEM, enough per-step DMA), otherwise the largest feasible bn.
        big = [bn for bn in feas if bn * tc * hw_t * itemsize >= step_target]
        return min(big) if big else max(feas)

    # ---- 1R + 1W path (whole channel-tile slab resident) --------------------
    res_fit = lambda tc, bn: resident_bytes(tc, bn) <= budget
    for tc in c_cands:
        bn = pick_bn(tc, hw, res_fit)
        if bn is None:
            continue
        # megacore: with >= 2 TensorCores make sure the "parallel" channel axis
        # has at least 2 tiles so both cores get work.
        if ncores >= 2 and c // tc < 2:
            for tc2 in c_cands:
                if tc2 < tc and c // tc2 >= 2:
                    bn2 = pick_bn(tc2, hw, res_fit)
                    if bn2 is not None:
                        tc, bn = tc2, bn2
                    break
        return "resident", tc, bn, hw

    # ---- streaming path (2R + 1W) -------------------------------------------
    def stream_fit(hw_t):
        return lambda tc, bn: 4 * bn * tc * hw_t * itemsize <= budget

    for tc in c_cands:
        bn = pick_bn(tc, hw, stream_fit(hw))
        if bn is not None:
            return "stream", tc, bn, hw

    # ---- streaming with lane-dense HW tiling (multiples of 128) -------------
    tc = c_cands[-1]
    for hw_t in _divisors_desc(hw):
        if hw_t >= hw or hw_t % 128 != 0:
            continue
        bn = pick_bn(tc, hw_t, stream_fit(hw_t))
        if bn is not None:
            return "stream", tc, bn, hw_t
    # TODO(synk): huge feature maps whose HW has no 128-multiple divisor need a
    # masked tail block; fall back to an untiled HW block (compile fails loudly
    # rather than computing a wrong mean).
    return "stream", tc, 1, hw


# ---------------------------------------------------------------------------
# Wrapper
# ---------------------------------------------------------------------------

@functools.partial(jax.jit, static_argnums=(3, 4))
def batchnorm2d_centering(x, bias, running_mean, momentum=0.1, plan_override=None):
    """Training-mode forward of BatchNorm2dCentering.

    Args:
      x:             (N, C, H, W)
      bias:          (C,)
      running_mean:  (C,)
      momentum:      python float (EMA factor)
      plan_override: optional static tuple (mode, tile_c, bn, hw_t) for testing.
    Returns:
      output:            (N, C, H, W), same dtype as x
      new_running_mean:  (1, C, 1, 1) — matches torch's in-place reassignment shape
    """
    n, c, h, w = x.shape
    hw = h * w
    momentum = float(momentum)
    inv_count = 1.0 / float(n * hw)
    itemsize = jnp.dtype(x.dtype).itemsize
    sub = _sublane_multiple(x.dtype)

    vmem_cap = _vmem_capacity_bytes()
    # ~16 MiB headroom for compiler temps: 48 MiB on v7x, 112 MiB on v5e/v6e.
    vmem_limit = max(vmem_cap - 16 * 1024 * 1024, 32 * 1024 * 1024)
    budget = int(vmem_limit * 0.9)            # slack inside the limit for small operands

    if plan_override is not None:
        mode, tile_c, bn, hw_t = plan_override
    else:
        mode, tile_c, bn, hw_t = _plan_tiles(n, c, hw, itemsize, sub, budget,
                                             _num_tensorcores())

    assert c % tile_c == 0 and n % bn == 0 and hw % hw_t == 0, "invalid tile plan"
    if mode == "resident":
        assert hw_t == hw, "resident plan requires an untiled HW axis"

    c_tiles = c // tile_c
    nb = n // bn
    hb = hw // hw_t

    x3d = x.reshape(n, c, hw)                     # pure reshape, no HBM transpose
    bias3d = bias.reshape(1, c, 1)
    rm3d = running_mean.reshape(1, c, 1).astype(jnp.float32)

    out_shape = (jax.ShapeDtypeStruct((n, c, hw), x.dtype),
                 jax.ShapeDtypeStruct((1, c, 1), jnp.float32))

    if mode == "resident" and nb > 1:
        # Cached 1R+1W path: pass 0 stashes blocks in VMEM; pass 1 pins the x
        # block index to the last pass-0 block so no DMA is re-issued.
        kernel = functools.partial(_bn_cached_kernel,
                                   inv_count=inv_count, momentum=momentum)
        grid = (c_tiles, 2, nb)
        x_spec = pl.BlockSpec((bn, tile_c, hw),
                              lambda ci, p, nn: (nn * (1 - p) + (nb - 1) * p, ci, 0))
        vec_spec = pl.BlockSpec((1, tile_c, 1), lambda ci, p, nn: (0, ci, 0))
        # Output pinned to block 0 during pass 0 (no garbage writebacks), streams
        # every (nn, ci) block during pass 1.
        out_spec = pl.BlockSpec((bn, tile_c, hw), lambda ci, p, nn: (nn * p, ci, 0))
        scratch = [pltpu.VMEM((nb, bn, tile_c, hw), x.dtype),     # slab cache
                   pltpu.VMEM((1, tile_c, 1), jnp.float32)]       # sums -> (bias - mean)
        semantics = ("parallel", "arbitrary", "arbitrary")
    else:
        # Streaming path (also covers the nb == hb == 1 resident case, where the
        # unchanged x block index means no second HBM read).
        kernel = functools.partial(_bn_stream_kernel,
                                   inv_count=inv_count, momentum=momentum)
        grid = (c_tiles, 2, nb, hb)
        x_spec = pl.BlockSpec((bn, tile_c, hw_t),
                              lambda ci, p, nn, hh: (nn, ci, hh))
        vec_spec = pl.BlockSpec((1, tile_c, 1), lambda ci, p, nn, hh: (0, ci, 0))
        out_spec = pl.BlockSpec((bn, tile_c, hw_t),
                                lambda ci, p, nn, hh: (nn * p, ci, hh * p))
        scratch = [pltpu.VMEM((1, tile_c, 1), jnp.float32)]
        semantics = ("parallel", "arbitrary", "arbitrary", "arbitrary")

    out3d, new_rm = pl.pallas_call(
        kernel,
        out_shape=out_shape,
        grid_spec=pltpu.PrefetchScalarGridSpec(
            num_scalar_prefetch=0,
            grid=grid,
            in_specs=[x_spec, vec_spec, vec_spec],
            out_specs=(out_spec, vec_spec),
            scratch_shapes=scratch,
        ),
        compiler_params=pltpu.CompilerParams(
            dimension_semantics=semantics,
            vmem_limit_bytes=vmem_limit,
        ),
    )(x3d, bias3d, rm3d)

    out = out3d.reshape(n, c, h, w)
    new_running_mean = new_rm.reshape(1, c, 1, 1).astype(running_mean.dtype)
    # TODO(synk): num_batches_tracked (host-side long counter) is left to the caller.
    return out, new_running_mean


# ---------------------------------------------------------------------------
# Self-test
# ---------------------------------------------------------------------------

if __name__ == "__main__":
    key = jax.random.PRNGKey(0)
    kx, kb, kr = jax.random.split(key, 3)
    momentum = 0.1

    def reference(x, bias, running_mean, momentum):
        mean = jnp.mean(x, axis=(0, 2, 3), keepdims=True)
        out = x - mean + bias.reshape(1, -1, 1, 1)
        new_rm = ((1.0 - momentum) * running_mean.reshape(1, -1, 1, 1)
                  + momentum * mean)
        return out, new_rm

    # --- primary small shape (auto plan: resident / 1R+1W) -------------------
    N, C, H, W = 2, 4, 16, 16
    x = jax.random.normal(kx, (N, C, H, W), dtype=jnp.float32)
    bias = 0.1 * jax.random.normal(kb, (C,), dtype=jnp.float32)
    running_mean = 0.1 * jax.random.normal(kr, (C,), dtype=jnp.float32)

    out_ref, rm_ref = reference(x, bias, running_mean, momentum)
    out, new_rm = batchnorm2d_centering(x, bias, running_mean, momentum)
    out = jax.block_until_ready(out)
    new_rm = jax.block_until_ready(new_rm)

    assert out.shape == (N, C, H, W)
    assert jnp.allclose(out, out_ref, atol=1e-5), "output mismatch (auto plan)"
    assert jnp.allclose(new_rm, rm_ref, atol=1e-6), "running_mean mismatch (auto plan)"

    # --- lock in the cached / pinned-index and streaming / HW-tiled paths ----
    N2, C2, H2, W2 = 4, 16, 16, 16
    x2 = jax.random.normal(kx, (N2, C2, H2, W2), dtype=jnp.float32)
    bias2 = 0.1 * jax.random.normal(kb, (C2,), dtype=jnp.float32)
    rm2 = 0.1 * jax.random.normal(kr, (C2,), dtype=jnp.float32)
    out_ref2, rm_ref2 = reference(x2, bias2, rm2, momentum)

    test_plans = (
        ("resident", 8, 1, 256),   # cached kernel: 2 channel tiles, 4 batch blocks
        ("stream", 8, 2, 256),     # streaming kernel: 2 channel tiles, 2 batch blocks
        ("stream", 16, 1, 128),    # streaming kernel with lane-dense HW tiling
    )
    for plan in test_plans:
        o2, r2 = batchnorm2d_centering(x2, bias2, rm2, momentum, plan)
        o2 = jax.block_until_ready(o2)
        r2 = jax.block_until_ready(r2)
        assert jnp.allclose(o2, out_ref2, atol=1e-5), f"output mismatch ({plan})"
        assert jnp.allclose(r2, rm_ref2, atol=1e-6), f"running_mean mismatch ({plan})"

    print("KERNEL_OK")
</pallas_src>

<mosaic_0001>
module attributes {stable_mosaic.version = 11 : i64} {
  func.func @_bn_stream_kernel(%arg0: i32, %arg1: i32, %arg2: i32, %arg3: i32, %arg4: memref<2x4x256xf32, #tpu.memory_space<vmem>>, %arg5: memref<1x4x1xf32, #tpu.memory_space<vmem>>, %arg6: memref<1x4x1xf32, #tpu.memory_space<vmem>>, %arg7: memref<2x4x256xf32, #tpu.memory_space<vmem>>, %arg8: memref<1x4x1xf32, #tpu.memory_space<vmem>>, %arg9: memref<1x4x1xf32, #tpu.memory_space<vmem>>) attributes {dimension_semantics = [#tpu.dimension_semantics<parallel>, #tpu.dimension_semantics<arbitrary>, #tpu.dimension_semantics<arbitrary>, #tpu.dimension_semantics<arbitrary>], iteration_bounds = array<i64: 1, 2, 1, 1>, scalar_prefetch = 0 : i64, scratch_operands = 1 : i64, tpu.core_type = #tpu.core_type<tc>, window_params = [{transform_indices = @transform_0, window_bounds = array<i64: 2, 4, 256>}, {transform_indices = @transform_1, window_bounds = array<i64: 1, 4, 1>}, {transform_indices = @transform_2, window_bounds = array<i64: 1, 4, 1>}, {transform_indices = @transform_3, window_bounds = array<i64: 2, 4, 256>}, {transform_indices = @transform_4, window_bounds = array<i64: 1, 4, 1>}]} {
    %c0_i32 = arith.constant 0 : i32
    %0 = arith.cmpi eq, %arg1, %c0_i32 : i32
    %c0_i32_0 = arith.constant 0 : i32
    %1 = arith.cmpi eq, %arg2, %c0_i32_0 : i32
    %2 = arith.andi %0, %1 : i1
    %c0_i32_1 = arith.constant 0 : i32
    %3 = arith.cmpi eq, %arg3, %c0_i32_1 : i32
    %4 = arith.andi %2, %3 : i1
    %5 = arith.extui %4 : i1 to i32
    %c0_i32_2 = arith.constant 0 : i32
    %6 = arith.cmpi ne, %5, %c0_i32_2 : i32
    scf.if %6 {
      %cst = arith.constant 0.000000e+00 : f32
      %20 = vector.broadcast %cst : f32 to vector<1x4x1xf32>
      %c0 = arith.constant 0 : index
      %c0_10 = arith.constant 0 : index
      %c0_11 = arith.constant 0 : index
      %21 = vector.load %arg9[%c0, %c0_10, %c0_11] : memref<1x4x1xf32, #tpu.memory_space<vmem>>, vector<1x4x1xf32>
      tpu.vector_store %arg9[%c0, %c0_10, %c0_11], %20 {strides = array<i32>} : memref<1x4x1xf32, #tpu.memory_space<vmem>>, vector<1x4x1xf32>,
    } else {
    }
    %c0_i32_3 = arith.constant 0 : i32
    %7 = arith.cmpi eq, %arg1, %c0_i32_3 : i32
    %8 = arith.extui %7 : i1 to i32
    %c0_i32_4 = arith.constant 0 : i32
    %9 = arith.cmpi ne, %8, %c0_i32_4 : i32
    scf.if %9 {
      %c0 = arith.constant 0 : index
      %c0_10 = arith.constant 0 : index
      %c0_11 = arith.constant 0 : index
      %20 = vector.load %arg4[%c0, %c0_10, %c0_11] : memref<2x4x256xf32, #tpu.memory_space<vmem>>, vector<2x4x256xf32>
      %cst = arith.constant dense<0.000000e+00> : vector<2x4xf32>
      %21 = vector.multi_reduction <add>, %20, %cst [2] : vector<2x4x256xf32> to vector<2x4xf32>
      %22 = vector.shape_cast %21 : vector<2x4xf32> to vector<2x4x1xf32>
      %c0_12 = arith.constant 0 : index
      %c0_13 = arith.constant 0 : index
      %c0_14 = arith.constant 0 : index
      %23 = vector.load %arg9[%c0_12, %c0_13, %c0_14] : memref<1x4x1xf32, #tpu.memory_space<vmem>>, vector<1x4x1xf32>
      %cst_15 = arith.constant dense<0.000000e+00> : vector<4x1xf32>
      %24 = vector.multi_reduction <add>, %22, %cst_15 [0] : vector<2x4x1xf32> to vector<4x1xf32>
      %25 = vector.shape_cast %24 : vector<4x1xf32> to vector<1x4x1xf32>
      %26 = arith.addf %23, %25 : vector<1x4x1xf32>
      %c0_16 = arith.constant 0 : index
      %c0_17 = arith.constant 0 : index
      %c0_18 = arith.constant 0 : index
      %27 = vector.load %arg9[%c0_16, %c0_17, %c0_18] : memref<1x4x1xf32, #tpu.memory_space<vmem>>, vector<1x4x1xf32>
      tpu.vector_store %arg9[%c0_16, %c0_17, %c0_18], %26 {strides = array<i32>} : memref<1x4x1xf32, #tpu.memory_space<vmem>>, vector<1x4x1xf32>,
    } else {
    }
    %c0_i32_5 = arith.constant 0 : i32
    %10 = arith.cmpi eq, %arg1, %c0_i32_5 : i32
    %c0_i32_6 = arith.constant 0 : i32
    %11 = arith.cmpi eq, %arg2, %c0_i32_6 : i32
    %12 = arith.andi %10, %11 : i1
    %c0_i32_7 = arith.constant 0 : i32
    %13 = arith.cmpi eq, %arg3, %c0_i32_7 : i32
    %14 = arith.andi %12, %13 : i1
    %15 = arith.extui %14 : i1 to i32
    %c0_i32_8 = arith.constant 0 : i32
    %16 = arith.cmpi ne, %15, %c0_i32_8 : i32
    scf.if %16 {
      %c0 = arith.constant 0 : index
      %c0_10 = arith.constant 0 : index
      %c0_11 = arith.constant 0 : index
      %20 = vector.load %arg9[%c0, %c0_10, %c0_11] : memref<1x4x1xf32, #tpu.memory_space<vmem>>, vector<1x4x1xf32>
      %cst = arith.constant 0.001953125 : f32
      %21 = vector.broadcast %cst : f32 to vector<1x4x1xf32>
      %22 = arith.mulf %20, %21 : vector<1x4x1xf32>
      %c0_12 = arith.constant 0 : index
      %c0_13 = arith.constant 0 : index
      %c0_14 = arith.constant 0 : index
      %23 = vector.load %arg6[%c0_12, %c0_13, %c0_14] : memref<1x4x1xf32, #tpu.memory_space<vmem>>, vector<1x4x1xf32>
      %cst_15 = arith.constant 0.899999976 : f32
      %24 = vector.broadcast %cst_15 : f32 to vector<1x4x1xf32>
      %25 = arith.mulf %24, %23 : vector<1x4x1xf32>
      %cst_16 = arith.constant 1.000000e-01 : f32
      %26 = vector.broadcast %cst_16 : f32 to vector<1x4x1xf32>
      %27 = arith.mulf %26, %22 : vector<1x4x1xf32>
      %28 = arith.addf %25, %27 : vector<1x4x1xf32>
      %c0_17 = arith.constant 0 : index
      %c0_18 = arith.constant 0 : index
      %c0_19 = arith.constant 0 : index
      %29 = vector.load %arg8[%c0_17, %c0_18, %c0_19] : memref<1x4x1xf32, #tpu.memory_space<vmem>>, vector<1x4x1xf32>
      tpu.vector_store %arg8[%c0_17, %c0_18, %c0_19], %28 {strides = array<i32>} : memref<1x4x1xf32, #tpu.memory_space<vmem>>, vector<1x4x1xf32>,
      %c0_20 = arith.constant 0 : index
      %c0_21 = arith.constant 0 : index
      %c0_22 = arith.constant 0 : index
      %30 = vector.load %arg5[%c0_20, %c0_21, %c0_22] : memref<1x4x1xf32, #tpu.memory_space<vmem>>, vector<1x4x1xf32>
      %31 = arith.subf %30, %22 : vector<1x4x1xf32>
      %c0_23 = arith.constant 0 : index
      %c0_24 = arith.constant 0 : index
      %c0_25 = arith.constant 0 : index
      %32 = vector.load %arg9[%c0_23, %c0_24, %c0_25] : memref<1x4x1xf32, #tpu.memory_space<vmem>>, vector<1x4x1xf32>
      tpu.vector_store %arg9[%c0_23, %c0_24, %c0_25], %31 {strides = array<i32>} : memref<1x4x1xf32, #tpu.memory_space<vmem>>, vector<1x4x1xf32>,
    } else {
    }
    %c1_i32 = arith.constant 1 : i32
    %17 = arith.cmpi eq, %arg1, %c1_i32 : i32
    %18 = arith.extui %17 : i1 to i32
    %c0_i32_9 = arith.constant 0 : i32
    %19 = arith.cmpi ne, %18, %c0_i32_9 : i32
    scf.if %19 {
      %c0 = arith.constant 0 : index
      %c0_10 = arith.constant 0 : index
      %c0_11 = arith.constant 0 : index
      %20 = vector.load %arg4[%c0, %c0_10, %c0_11] : memref<2x4x256xf32, #tpu.memory_space<vmem>>, vector<2x4x256xf32>
      %c0_12 = arith.constant 0 : index
      %c0_13 = arith.constant 0 : index
      %c0_14 = arith.constant 0 : index
      %21 = vector.load %arg9[%c0_12, %c0_13, %c0_14] : memref<1x4x1xf32, #tpu.memory_space<vmem>>, vector<1x4x1xf32>
      %22 = vector.broadcast %21 : vector<1x4x1xf32> to vector<2x4x256xf32>
      %23 = arith.addf %20, %22 : vector<2x4x256xf32>
      %c0_15 = arith.constant 0 : index
      %c0_16 = arith.constant 0 : index
      %c0_17 = arith.constant 0 : index
      %24 = vector.load %arg7[%c0_15, %c0_16, %c0_17] : memref<2x4x256xf32, #tpu.memory_space<vmem>>, vector<2x4x256xf32>
      tpu.vector_store %arg7[%c0_15, %c0_16, %c0_17], %23 {strides = array<i32>} : memref<2x4x256xf32, #tpu.memory_space<vmem>>, vector<2x4x256xf32>,
    } else {
    }
    return
  }
  func.func @transform_0(%arg0: i32, %arg1: i32, %arg2: i32, %arg3: i32) -> (i32, i32, i32) {
    %c0_i32 = arith.constant 0 : i32
    return %arg2, %arg0, %arg3 : i32, i32, i32
  }
  func.func @transform_1(%arg0: i32, %arg1: i32, %arg2: i32, %arg3: i32) -> (i32, i32, i32) {
    %c0_i32 = arith.constant 0 : i32
    %c0_i32_0 = arith.constant 0 : i32
    %c0_i32_1 = arith.constant 0 : i32
    return %c0_i32, %arg0, %c0_i32_0 : i32, i32, i32
  }
  func.func @transform_2(%arg0: i32, %arg1: i32, %arg2: i32, %arg3: i32) -> (i32, i32, i32) {
    %c0_i32 = arith.constant 0 : i32
    %c0_i32_0 = arith.constant 0 : i32
    %c0_i32_1 = arith.constant 0 : i32
    return %c0_i32, %arg0, %c0_i32_0 : i32, i32, i32
  }
  func.func @transform_3(%arg0: i32, %arg1: i32, %arg2: i32, %arg3: i32) -> (i32, i32, i32) {
    %0 = arith.muli %arg2, %arg1 : i32
    %1 = arith.muli %arg3, %arg1 : i32
    %c0_i32 = arith.constant 0 : i32
    return %0, %arg0, %1 : i32, i32, i32
  }
  func.func @transform_4(%arg0: i32, %arg1: i32, %arg2: i32, %arg3: i32) -> (i32, i32, i32) {
    %c0_i32 = arith.constant 0 : i32
    %c0_i32_0 = arith.constant 0 : i32
    %c0_i32_1 = arith.constant 0 : i32
    return %c0_i32, %arg0, %c0_i32_0 : i32, i32, i32
  }
}

</mosaic_0001>

<llo_original>
// kernel: batchnorm2d_centering.1
$region0: #{batchnorm2d_centering.1}
  #allocation0 [shape = 'u32[]', space=smem, size = 0x4, offset = 0x4, fixed_abs, tag = 'smem constant byte address 0x4 - core index']
  #allocation1 [shape = 'u32[144,128]{1,0:T(1,128)}', space=vmem, size = 0x12000, scoped, tag = 'internal scratch']
  #allocation2 [shape = 'f32[1,4,1]{2,1,0:T(4,128)}', space=vmem, size = 0x800, scoped, tag = 'scratch operand']
  %s0 = inlined_call_operand.vmem [shape: f32[2,4,256], index: 0, kind: input, shape index: {}]
  %s1 = inlined_call_operand.vmem [shape: f32[1,4,1], index: 1, kind: input, shape index: {}]
  %s2 = inlined_call_operand.vmem [shape: f32[1,4,1], index: 2, kind: input, shape index: {}]
  %s3 = inlined_call_operand.vmem [shape: f32[2,4,256], index: 3, kind: output, shape index: {0}]
  %s4 = inlined_call_operand.vmem [shape: f32[1,4,1], index: 4, kind: output, shape index: {1}]
  %5 = xla_tuple %s3, %s4
  %s6 = sld [smem:[#allocation0]]
  $region69: #{batchnorm2d_centering.1} parent=0
    _
  %s8 = ssub.s32 1, %s6
  %s9 = scalar_select 0, %s8, %s6
  loop: start=0, step=1, limit=4
  $region2: #{batchnorm2d_centering.1} parent=0 // loop_pre_header
    _
  $region3: #{batchnorm2d_centering.1} parent=0 // loop_header
    %s11 = sphi 0, %s15
    %p12 = scmp.ge.s32.totalorder %s11, 4
    %s18 = sphi 0, %s44
    %s19 = sphi 0, %s40
    %s20 = sphi 0, %s36
    %s21 = sphi 0, %s32
    %s22 = sphi 0, %s18
    %s23 = sphi 0, %s19
    %s24 = sphi 0, %s20
    %s25 = sphi 0, %s21
    %s26 = sphi 0, %s22
    %s27 = sphi 0, %s23
    %s28 = sphi 0, %s24
    %s29 = sphi 0, %s25
    %s51 = sphi 0, %s53
    %s54 = sphi 0, %s51
    %s55 = sphi 0, %s54
    %s71 = sphi 0, %s55
    %s77 = sphi 0, %s79
    %s80 = sphi 0, %s77
    %s81 = sphi 0, %s80
    %s97 = sphi 0, %s81
    %s103 = sphi 0, %s105
    %s106 = sphi 0, %s103
    %s107 = sphi 0, %s106
    %s123 = sphi 0, %s107
    %s137 = sphi 0, %s139
    %s140 = sphi 0, %s137
    %s141 = sphi 0, %s140
    %s157 = sphi 0, %s141
    %s163 = sphi 0, %s165
    %s166 = sphi 0, %s163
    %s167 = sphi 0, %s166
    %s183 = sphi 0, %s167
  $region4: #{batchnorm2d_centering.1} parent=0 // loop_header_branch
    %14 = sbr.rel (%p12) target = $region8
  $region5: #{batchnorm2d_centering.1} parent=0 // loop_body
    %s16 = ssub.s32 %s11, 1
    %s17 = ssub.s32 %s11, 2
    %s30 = sadd.s32 1, %s21
    %p31 = scmp.ge.s32.totalorder %s30, 1
    %s32 = scalar_select %p31, 0, %s30
    %s33 = sadd.s32 1, %s20
    %s34 = scalar_select %p31, %s33, %s20
    %p35 = scmp.ge.s32.totalorder %s34, 1
    %s36 = scalar_select %p35, 0, %s34
    %s37 = sadd.s32 1, %s19
    %s38 = scalar_select %p35, %s37, %s19
    %p39 = scmp.ge.s32.totalorder %s38, 2
    %s40 = scalar_select %p39, 0, %s38
    %s41 = sadd.s32 1, %s18
    %s42 = scalar_select %p39, %s41, %s18
    %p43 = scmp.ge.s32.totalorder %s42, 1
    %s44 = scalar_select %p43, 0, %s42
    %s45 = ssub.s32 %s20, %s36
    %s46 = ssub.s32 %s18, %s44
    %s47 = sor.u32 %s45, %s46
    %s48 = ssub.s32 %s21, %s32
    %s49 = sor.u32 %s47, %s48
    %p50 = scmp.eq.s32.totalorder %s49, 0
    %s52 = sadd.s32 %s51, 1
    %s53 = scalar_select %p50, %s51, %s52
    %p56 = pneg %p50
    %p57 = scmp.eq.s32.totalorder %s11, 1
    %p58 = por %p56, %p57
    %p59 = scmp.ne.s32.totalorder %s51, %s54
    %p60 = scmp.eq.s32.totalorder %s11, 0
    %p61 = por %p59, %p60
    %p62 = scmp.ne.s32.totalorder %s51, %s54
    %p63 = scmp.eq.s32.totalorder %s16, 1
    %p64 = por %p62, %p63
    %p65 = scmp.ne.s32.totalorder %s54, %s55
    %p66 = scmp.eq.s32.totalorder %s16, 0
    %p67 = por %p65, %p66
    %p68 = scmp.ne.s32.totalorder %s54, %s55
    %p69 = scmp.eq.s32.totalorder %s17, 1
    %p70 = por %p68, %p69
    %p72 = scmp.ne.s32.totalorder %s55, %s71
    %p73 = scmp.eq.s32.totalorder %s17, 0
    %p74 = por %p72, %p73
    %s75 = ssub.s32 %s18, %s44
    %p76 = scmp.eq.s32.totalorder %s75, 0
    %s78 = sadd.s32 %s77, 1
    %s79 = scalar_select %p76, %s77, %s78
    %p82 = pneg %p76
    %p83 = scmp.eq.s32.totalorder %s11, 1
    %p84 = por %p82, %p83
    %p85 = scmp.ne.s32.totalorder %s77, %s80
    %p86 = scmp.eq.s32.totalorder %s11, 0
    %p87 = por %p85, %p86
    %p88 = scmp.ne.s32.totalorder %s77, %s80
    %p89 = scmp.eq.s32.totalorder %s16, 1
    %p90 = por %p88, %p89
    %p91 = scmp.ne.s32.totalorder %s80, %s81
    %p92 = scmp.eq.s32.totalorder %s16, 0
    %p93 = por %p91, %p92
    %p94 = scmp.ne.s32.totalorder %s80, %s81
    %p95 = scmp.eq.s32.totalorder %s17, 1
    %p96 = por %p94, %p95
    %p98 = scmp.ne.s32.totalorder %s81, %s97
    %p99 = scmp.eq.s32.totalorder %s17, 0
    %p100 = por %p98, %p99
    %s101 = ssub.s32 %s18, %s44
    %p102 = scmp.eq.s32.totalorder %s101, 0
    %s104 = sadd.s32 %s103, 1
    %s105 = scalar_select %p102, %s103, %s104
    %p108 = pneg %p102
    %p109 = scmp.eq.s32.totalorder %s11, 1
    %p110 = por %p108, %p109
    %p111 = scmp.ne.s32.totalorder %s103, %s106
    %p112 = scmp.eq.s32.totalorder %s11, 0
    %p113 = por %p111, %p112
    %p114 = scmp.ne.s32.totalorder %s103, %s106
    %p115 = scmp.eq.s32.totalorder %s16, 1
    %p116 = por %p114, %p115
    %p117 = scmp.ne.s32.totalorder %s106, %s107
    %p118 = scmp.eq.s32.totalorder %s16, 0
    %p119 = por %p117, %p118
    %p120 = scmp.ne.s32.totalorder %s106, %s107
    %p121 = scmp.eq.s32.totalorder %s17, 1
    %p122 = por %p120, %p121
    %p124 = scmp.ne.s32.totalorder %s107, %s123
    %p125 = scmp.eq.s32.totalorder %s17, 0
    %p126 = por %p124, %p125
    %s127 = smul.u32 %s20, %s19
    %s128 = smul.u32 %s21, %s19
    %s129 = smul.u32 %s36, %s40
    %s130 = smul.u32 %s32, %s40
    %s131 = ssub.s32 %s127, %s129
    %s132 = ssub.s32 %s18, %s44
    %s133 = sor.u32 %s131, %s132
    %s134 = ssub.s32 %s128, %s130
    %s135 = sor.u32 %s133, %s134
    %p136 = scmp.eq.s32.totalorder %s135, 0
    %s138 = sadd.s32 %s137, 1
    %s139 = scalar_select %p136, %s137, %s138
    %p142 = pneg %p136
    %p143 = scmp.eq.s32.totalorder %s11, 1
    %p144 = por %p142, %p143
    %p145 = scmp.ne.s32.totalorder %s137, %s140
    %p146 = scmp.eq.s32.totalorder %s11, 0
    %p147 = por %p145, %p146
    %p148 = scmp.ne.s32.totalorder %s137, %s140
    %p149 = scmp.eq.s32.totalorder %s16, 1
    %p150 = por %p148, %p149
    %p151 = scmp.ne.s32.totalorder %s140, %s141
    %p152 = scmp.eq.s32.totalorder %s16, 0
    %p153 = por %p151, %p152
    %p154 = scmp.ne.s32.totalorder %s140, %s141
    %p155 = scmp.eq.s32.totalorder %s17, 1
    %p156 = por %p154, %p155
    %p158 = scmp.ne.s32.totalorder %s141, %s157
    %p159 = scmp.eq.s32.totalorder %s17, 0
    %p160 = por %p158, %p159
    %s161 = ssub.s32 %s18, %s44
    %p162 = scmp.eq.s32.totalorder %s161, 0
    %s164 = sadd.s32 %s163, 1
    %s165 = scalar_select %p162, %s163, %s164
    %p168 = pneg %p162
    %p169 = scmp.eq.s32.totalorder %s11, 1
    %p170 = por %p168, %p169
    %p171 = scmp.ne.s32.totalorder %s163, %s166
    %p172 = scmp.eq.s32.totalorder %s11, 0
    %p173 = por %p171, %p172
    %p174 = scmp.ne.s32.totalorder %s163, %s166
    %p175 = scmp.eq.s32.totalorder %s16, 1
    %p176 = por %p174, %p175
    %p177 = scmp.ne.s32.totalorder %s166, %s167
    %p178 = scmp.eq.s32.totalorder %s16, 0
    %p179 = por %p177, %p178
    %p180 = scmp.ne.s32.totalorder %s166, %s167
    %p181 = scmp.eq.s32.totalorder %s17, 1
    %p182 = por %p180, %p181
    %p184 = scmp.ne.s32.totalorder %s167, %s183
    %p185 = scmp.eq.s32.totalorder %s17, 0
    %p186 = por %p184, %p185
    %p187 = scmp.le.s32.totalorder 1, %s11
    %p188 = scmp.lt.s32.totalorder %s11, 3
    %p189 = pnand %p187, %p188
    %p190 = pneg %p189
    // Predicated region
    $region9: #{batchnorm2d_centering.1} parent=5 // pred_check
      _
    $region10: #{batchnorm2d_centering.1} parent=5 // pred_check_branch
      %192 = sbr.rel (%p189) target = $region12
    $region11: #{batchnorm2d_centering.1} parent=5 // pred_region
      %s193 = ssub.s32 %s11, 1
      // Predicated region
      $region13: #{batchnorm2d_centering.1} parent=11 // pred_check
        %p194 = pneg %p67
      $region14: #{batchnorm2d_centering.1} parent=11 // pred_check_branch
        %196 = sbr.rel (%p194) target = $region16
      $region15: #{batchnorm2d_centering.1} parent=11 // pred_region
        %s197 = smul.u32 2, %s24
        %s198 = smul.u32 2, %s25
        %p199 = scmp.lt.s32.totalorder %s197, 1
        %s200 = scalar_select %p199, %s197, 1
        %p201 = scmp.lt.s32.totalorder %s22, 0
        %s202 = scalar_select %p201, %s22, 0
        %p203 = scmp.lt.s32.totalorder %s198, 1
        %s204 = scalar_select %p203, %s198, 1
        %s205 = smul.addr %s202, 2
        %s206 = sadd.s32 %s204, %s205
        %s207 = smul.addr %s200, 2
        %s208 = sadd.s32 %s206, %s207
        %s209 = smul.addr %s208, 4
        %s210 = scalar_lea.vmem %s0, %s209
        %s211 = smul.u32 2, %s24
        %s212 = smul.u32 2, %s25
      $region16: #{batchnorm2d_centering.1} parent=11 // pred_fallthru
        _
      // Predicated region
      $region17: #{batchnorm2d_centering.1} parent=11 // pred_check
        %p213 = pneg %p93
      $region18: #{batchnorm2d_centering.1} parent=11 // pred_check_branch
        %215 = sbr.rel (%p213) target = $region20
      $region19: #{batchnorm2d_centering.1} parent=11 // pred_region
        %p216 = scmp.lt.s32.totalorder %s22, 0
        %s217 = scalar_select %p216, %s22, 0
        %s218 = smul.addr %s217, 4
        %s219 = scalar_lea.vmem %s1, %s218
      $region20: #{batchnorm2d_centering.1} parent=11 // pred_fallthru
        _
      // Predicated region
      $region21: #{batchnorm2d_centering.1} parent=11 // pred_check
        %p220 = pneg %p119
      $region22: #{batchnorm2d_centering.1} parent=11 // pred_check_branch
        %222 = sbr.rel (%p220) target = $region24
      $region23: #{batchnorm2d_centering.1} parent=11 // pred_region
        %p223 = scmp.lt.s32.totalorder %s22, 0
        %s224 = scalar_select %p223, %s22, 0
        %s225 = smul.addr %s224, 4
        %s226 = scalar_lea.vmem %s2, %s225
      $region24: #{batchnorm2d_centering.1} parent=11 // pred_fallthru
        _
    $region12: #{batchnorm2d_centering.1} parent=5 // pred_fallthru
      _
    %p227 = scmp.lt.s32.totalorder %s11, 2
    // Predicated region
    $region25: #{batchnorm2d_centering.1} parent=5 // pred_check
      %p228 = pneg %p227
    $region26: #{batchnorm2d_centering.1} parent=5 // pred_check_branch
      %230 = sbr.rel (%p228) target = $region28
    $region27: #{batchnorm2d_centering.1} parent=5 // pred_region
      _
    $region28: #{batchnorm2d_centering.1} parent=5 // pred_fallthru
      _
    %p231 = scmp.le.s32.totalorder 1, %s11
    %p232 = scmp.lt.s32.totalorder %s11, 3
    %p233 = pnand %p231, %p232
    %p234 = pneg %p233
    // Predicated region
    $region29: #{batchnorm2d_centering.1} parent=5 // pred_check
      _
    $region30: #{batchnorm2d_centering.1} parent=5 // pred_check_branch
      %236 = sbr.rel (%p233) target = $region32
    $region31: #{batchnorm2d_centering.1} parent=5 // pred_region
      %s237 = ssub.s32 %s11, 1
      %s238 = smul.u32 2, %s24
      %s239 = smul.u32 2, %s25
      %p240 = scmp.lt.s32.totalorder %s238, 1
      %s241 = scalar_select %p240, %s238, 1
      %p242 = scmp.lt.s32.totalorder %s22, 0
      %s243 = scalar_select %p242, %s22, 0
      %p244 = scmp.lt.s32.totalorder %s239, 1
      %s245 = scalar_select %p244, %s239, 1
      %s246 = smul.addr %s243, 2
      %s247 = sadd.s32 %s245, %s246
      %s248 = smul.addr %s241, 2
      %s249 = sadd.s32 %s247, %s248
      %s250 = smul.addr %s249, 4
      %s251 = scalar_lea.vmem %s0, %s250
      %p252 = pneg %p67
      %p253 = pneg %p64
      %p254 = scmp.lt.s32.totalorder %s22, 0
      %s255 = scalar_select %p254, %s22, 0
      %s256 = smul.addr %s255, 4
      %s257 = scalar_lea.vmem %s1, %s256
      %p258 = pneg %p93
      %p259 = pneg %p90
      %p260 = scmp.lt.s32.totalorder %s22, 0
      %s261 = scalar_select %p260, %s22, 0
      %s262 = smul.addr %s261, 4
      %s263 = scalar_lea.vmem %s2, %s262
      %p264 = pneg %p119
      %p265 = pneg %p116
      %p266 = pneg %p153
      %p267 = pneg %p150
      %s268 = smul.u32 %s24, %s23
      %s269 = smul.u32 %s25, %s23
      %s270 = smul.u32 2, %s268
      %s271 = smul.u32 2, %s269
      %p272 = scmp.lt.s32.totalorder %s270, 1
      %s273 = scalar_select %p272, %s270, 1
      %p274 = scmp.lt.s32.totalorder %s22, 0
      %s275 = scalar_select %p274, %s22, 0
      %p276 = scmp.lt.s32.totalorder %s271, 1
      %s277 = scalar_select %p276, %s271, 1
      %s278 = smul.addr %s275, 2
      %s279 = sadd.s32 %s277, %s278
      %s280 = smul.addr %s273, 2
      %s281 = sadd.s32 %s279, %s280
      %s282 = smul.addr %s281, 4
      %s283 = scalar_lea.vmem %s3, %s282
      %p284 = pneg %p179
      %p285 = pneg %p176
      %p286 = scmp.lt.s32.totalorder %s22, 0
      %s287 = scalar_select %p286, %s22, 0
      %s288 = smul.addr %s287, 4
      %s289 = scalar_lea.vmem %s4, %s288
      %s290 = smul.u32 2, %s24
      %s291 = smul.u32 2, %s25
      %p292 = scmp.lt.s32.totalorder %s290, 1
      %s293 = scalar_select %p292, %s290, 1
      %p294 = scmp.lt.s32.totalorder %s22, 0
      %s295 = scalar_select %p294, %s22, 0
      %p296 = scmp.lt.s32.totalorder %s291, 1
      %s297 = scalar_select %p296, %s291, 1
      %s298 = smul.addr %s295, 2
      %s299 = sadd.s32 %s297, %s298
      %s300 = smul.addr %s293, 2
      %s301 = sadd.s32 %s299, %s300
      %s302 = smul.addr %s301, 4
      %s303 = scalar_lea.vmem %s0, %s302
      %s304 = smul.u32 2, %s24
      %s305 = smul.u32 2, %s25
      %p306 = scmp.lt.s32.totalorder %s22, 0
      %s307 = scalar_select %p306, %s22, 0
      %s308 = smul.addr %s307, 4
      %s309 = scalar_lea.vmem %s1, %s308
      %p310 = scmp.lt.s32.totalorder %s22, 0
      %s311 = scalar_select %p310, %s22, 0
      %s312 = smul.addr %s311, 4
      %s313 = scalar_lea.vmem %s2, %s312
      %s314 = smul.u32 %s24, %s23
      %s315 = smul.u32 %s25, %s23
      %s316 = smul.u32 2, %s314
      %s317 = smul.u32 2, %s315
      %p318 = scmp.lt.s32.totalorder %s316, 1
      %s319 = scalar_select %p318, %s316, 1
      %p320 = scmp.lt.s32.totalorder %s22, 0
      %s321 = scalar_select %p320, %s22, 0
      %p322 = scmp.lt.s32.totalorder %s317, 1
      %s323 = scalar_select %p322, %s317, 1
      %s324 = smul.addr %s321, 2
      %s325 = sadd.s32 %s323, %s324
      %s326 = smul.addr %s319, 2
      %s327 = sadd.s32 %s325, %s326
      %s328 = smul.addr %s327, 4
      %s329 = scalar_lea.vmem %s3, %s328
      %s330 = smul.u32 %s24, %s23
      %s331 = smul.u32 %s25, %s23
      %s332 = smul.u32 2, %s330
      %s333 = smul.u32 2, %s331
      %p334 = scmp.lt.s32.totalorder %s22, 0
      %s335 = scalar_select %p334, %s22, 0
      %s336 = smul.addr %s335, 4
      %s337 = scalar_lea.vmem %s4, %s336
      %p338 = scmp.eq.s32.totalorder %s23, 0
      %p339 = scmp.eq.s32.totalorder %s24, 0
      %p340 = pnand %p338, %p339
      %p341 = pneg %p340
      %p342 = scmp.eq.s32.totalorder %s25, 0
      %p343 = pnand %p341, %p342
      %p344 = pneg %p343
      // Predicated region
      $region33: #{batchnorm2d_centering.1} parent=31 // pred_check
        _
      $region34: #{batchnorm2d_centering.1} parent=31 // pred_check_branch
        %346 = sbr.rel (%p343) target = $region36
      $region35: #{batchnorm2d_centering.1} parent=31 // pred_region
        %vm347 = vcmask 3072
        %348 = vst.msk [vmem:[#allocation2] sm:$0xf] %vm347, 0.0
      $region36: #{batchnorm2d_centering.1} parent=31 // pred_fallthru
        _
      // Predicated region
      $region37: #{batchnorm2d_centering.1} parent=31 // pred_check
        %p349 = pneg %p338
      $region38: #{batchnorm2d_centering.1} parent=31 // pred_check_branch
        %351 = sbr.rel (%p349) target = $region40
      $region39: #{batchnorm2d_centering.1} parent=31 // pred_region
        %v352 = vld [vmem:[%s303] sm:$0xff]
        %v353 = vld [vmem:[%s303 + $0x8] sm:$0xff]
        %v356 = vcombine.high %v352, %v352
        %v357 = vcombine.high %v353, %v353
        %vm360 = vcmask 1043456
        %v361 = vsel %vm360, %v352, 0.0
        %v362 = vsel %vm360, %v356, 0.0
        %v363 = vadd.f32 %v361, %v362
        %364 = vadd.xlane.f32.xlu0 %v363
        %v365 = vpop.xlane.xlu0 %364
        %v366 = vsel %vm360, %v353, 0.0
        %v367 = vsel %vm360, %v357, 0.0
        %v368 = vadd.f32 %v366, %v367
        %369 = vadd.xlane.f32.xlu0 %v368
        %v370 = vpop.xlane.xlu0 %369
        %v371 = vld [vmem:[#allocation2] sm:$0xf]
        %v372 = vsel %vm360, %v365, 0.0
        %v373 = vsel %vm360, %v370, 0.0
        %v374 = vadd.f32 %v372, %v373
        %v375 = vadd.f32 %v371, %v374
        %vm376 = vcmask 3072
        %377 = vst.msk [vmem:[#allocation2] sm:$0xf] %vm376, %v375
      $region40: #{batchnorm2d_centering.1} parent=31 // pred_fallthru
        _
      // Predicated region
      $region41: #{batchnorm2d_centering.1} parent=31 // pred_check
        _
      $region42: #{batchnorm2d_centering.1} parent=31 // pred_check_branch
        %379 = sbr.rel (%p343) target = $region44
      $region43: #{batchnorm2d_centering.1} parent=31 // pred_region
        %v380 = vld [vmem:[#allocation2] sm:$0xf]
        %v381 = vmul.f32 %v380, 0.001953125
        %v382 = vld [vmem:[%s313] sm:$0xf]
        %v383 = vmul.f32 %v382, 0.9
        %v384 = vmul.f32 %v381, 0.1
        %v385 = vadd.f32 %v383, %v384
        %vm386 = vcmask 3072
        %387 = vst.msk [vmem:[%s337] sm:$0xf] %vm386, %v385
        %v388 = vld [vmem:[%s309] sm:$0xf]
        %v389 = vsub.f32 %v388, %v381
        %390 = vst.msk [vmem:[#allocation2] sm:$0xf] %vm386, %v389
      $region44: #{batchnorm2d_centering.1} parent=31 // pred_fallthru
        _
      %p391 = scmp.eq.s32.totalorder %s23, 1
      // Predicated region
      $region45: #{batchnorm2d_centering.1} parent=31 // pred_check
        %p392 = pneg %p391
      $region46: #{batchnorm2d_centering.1} parent=31 // pred_check_branch
        %394 = sbr.rel (%p392) target = $region48
      $region47: #{batchnorm2d_centering.1} parent=31 // pred_region
        %v395 = vld [vmem:[%s303] sm:$0xff]
        %v396 = vld [vmem:[%s303 + $0x8] sm:$0xff]
        %v397 = vld [vmem:[#allocation2] sm:$0xf]
        %399 = vset.pattern.permute.xlu0 0
        %400 = vperm.xlu0 %399, %v397
        %v401 = vpop.permute.xlu0 %400
        %v403 = vunpack.c.l.s4 839922192
        %v404 = vunpack.c.0.s8 %v403
        %v405 = vlaneseq
        %v406 = vshrl.u32 %v405, 7
        %v407 = vsub.s32 %v404, %v406
        %v408 = vrot.slane %v401, %v407
        %v410 = vadd.f32 %v395, %v408
        %v411 = vadd.f32 %v396, %v408
        %412 = vst [vmem:[%s329] sm:$0xff] %v410
        %413 = vst [vmem:[%s329 + $0x8] sm:$0xff] %v411
      $region48: #{batchnorm2d_centering.1} parent=31 // pred_fallthru
        _
      %s414 = smul.u32 %s24, %s23
      %s415 = smul.u32 %s25, %s23
      %s416 = smul.u32 2, %s414
      %s417 = smul.u32 2, %s415
      %p418 = scmp.lt.s32.totalorder %s416, 1
      %s419 = scalar_select %p418, %s416, 1
      %p420 = scmp.lt.s32.totalorder %s22, 0
      %s421 = scalar_select %p420, %s22, 0
      %p422 = scmp.lt.s32.totalorder %s417, 1
      %s423 = scalar_select %p422, %s417, 1
      %s424 = smul.addr %s421, 2
      %s425 = sadd.s32 %s423, %s424
      %s426 = smul.addr %s419, 2
      %s427 = sadd.s32 %s425, %s426
      %s428 = smul.addr %s427, 4
      %s429 = scalar_lea.vmem %s3, %s428
      %p430 = scmp.lt.s32.totalorder %s22, 0
      %s431 = scalar_select %p430, %s22, 0
      %s432 = smul.addr %s431, 4
      %s433 = scalar_lea.vmem %s4, %s432
      // Predicated region
      $region49: #{batchnorm2d_centering.1} parent=31 // pred_check
        %p434 = pneg %p150
      $region50: #{batchnorm2d_centering.1} parent=31 // pred_check_branch
        %436 = sbr.rel (%p434) target = $region52
      $region51: #{batchnorm2d_centering.1} parent=31 // pred_region
        %s437 = smul.u32 %s24, %s23
        %s438 = smul.u32 %s25, %s23
        %s439 = smul.u32 2, %s437
        %s440 = smul.u32 2, %s438
      $region52: #{batchnorm2d_centering.1} parent=31 // pred_fallthru
        _
      // Predicated region
      $region53: #{batchnorm2d_centering.1} parent=31 // pred_check
        %p441 = pneg %p176
      $region54: #{batchnorm2d_centering.1} parent=31 // pred_check_branch
        %443 = sbr.rel (%p441) target = $region56
      $region55: #{batchnorm2d_centering.1} parent=31 // pred_region
        _
      $region56: #{batchnorm2d_centering.1} parent=31 // pred_fallthru
        _
      // Predicated region
      $region57: #{batchnorm2d_centering.1} parent=31 // pred_check
        %p444 = pneg %p176
      $region58: #{batchnorm2d_centering.1} parent=31 // pred_check_branch
        %446 = sbr.rel (%p444) target = $region60
      $region59: #{batchnorm2d_centering.1} parent=31 // pred_region
        %p447 = scmp.lt.s32.totalorder %s22, 0
        %s448 = scalar_select %p447, %s22, 0
        %s449 = smul.addr %s448, 4
        %s450 = scalar_lea.vmem %s4, %s449
      $region60: #{batchnorm2d_centering.1} parent=31 // pred_fallthru
        _
    $region32: #{batchnorm2d_centering.1} parent=5 // pred_fallthru
      _
    %p451 = scmp.le.s32.totalorder 2, %s11
    // Predicated region
    $region61: #{batchnorm2d_centering.1} parent=5 // pred_check
      %p452 = pneg %p451
    $region62: #{batchnorm2d_centering.1} parent=5 // pred_check_branch
      %454 = sbr.rel (%p452) target = $region64
    $region63: #{batchnorm2d_centering.1} parent=5 // pred_region
      %s455 = ssub.s32 %s11, 2
      // Predicated region
      $region65: #{batchnorm2d_centering.1} parent=63 // pred_check
        %p456 = pneg %p156
      $region66: #{batchnorm2d_centering.1} parent=63 // pred_check_branch
        %458 = sbr.rel (%p456) target = $region68
      $region67: #{batchnorm2d_centering.1} parent=63 // pred_region
        %s459 = smul.u32 %s28, %s27
        %s460 = smul.u32 %s29, %s27
        %s461 = smul.u32 2, %s459
        %s462 = smul.u32 2, %s460
        %p463 = scmp.lt.s32.totalorder %s461, 1
        %s464 = scalar_select %p463, %s461, 1
        %p465 = scmp.lt.s32.totalorder %s26, 0
        %s466 = scalar_select %p465, %s26, 0
        %p467 = scmp.lt.s32.totalorder %s462, 1
        %s468 = scalar_select %p467, %s462, 1
        %s469 = smul.addr %s466, 2
        %s470 = sadd.s32 %s468, %s469
        %s471 = smul.addr %s464, 2
        %s472 = sadd.s32 %s470, %s471
        %s473 = smul.addr %s472, 4
        %s474 = scalar_lea.vmem %s3, %s473
      $region68: #{batchnorm2d_centering.1} parent=63 // pred_fallthru
        _
    $region64: #{batchnorm2d_centering.1} parent=5 // pred_fallthru
      _
  $region6: #{batchnorm2d_centering.1} parent=0 // loop_footer
    %s15 = sadd.s32 1, %s11
  $region7: #{batchnorm2d_centering.1} parent=0 // loop_footer_branch
    %10 = sbr.rel target = $region3
  $region8: #{batchnorm2d_centering.1} parent=0 // loop_exit
    _

</llo_original>
